<compile_context>
chip_gen: v7x
topology: tpu7x:2x2x1
jax: 0.10.0
libtpu: 0.0.40
codegen_flags: <defaults>
</compile_context>

<pallas_src>
import functools
import math

import jax
import jax.numpy as jnp
from jax.experimental import pallas as pl
from jax.experimental.pallas import tpu as pltpu

_LANE = 128
_SUBLANE = 8


def _round_up(x, m):
    return (x + m - 1) // m * m


def _mlp_kernel(x_ref, w1_ref, b1_ref, w2_ref, b2_ref, w3_ref, b3_ref, o_ref):
    # One batch tile of the 3-layer MLP.  All weights are VMEM-resident
    # (constant index_map), so each grid step is just MXU matmuls + a f32
    # VPU epilogue (bias add + ReLU).
    w_dt = w1_ref.dtype
    x = x_ref[...]                                                   # (TM, d_in_p) f32
    h1 = jnp.dot(x.astype(w_dt), w1_ref[...],
                 preferred_element_type=jnp.float32) + b1_ref[...]
    h1 = jnp.maximum(h1, 0.0)                                        # ReLU (f32)
    h2 = jnp.dot(h1.astype(w_dt), w2_ref[...],
                 preferred_element_type=jnp.float32) + b2_ref[...]
    h2 = jnp.maximum(h2, 0.0)                                        # ReLU (f32)
    o_ref[...] = (jnp.dot(h2.astype(w_dt), w3_ref[...],
                          preferred_element_type=jnp.float32)
                  + b3_ref[...]).astype(o_ref.dtype)


def prepare_params(params, weight_dtype=jnp.bfloat16):
    """Zero-pad feature dims to multiples of 128 and cast weights.

    Padded weight rows/cols and padded biases are zero, so padded hidden
    units emit ReLU(0)=0 and contribute nothing downstream; the math is
    identical to the unpadded MLP on the first `out_dim` outputs.
    """
    w1, b1 = params["w1"], params["b1"]
    w2, b2 = params["w2"], params["b2"]
    w3, b3 = params["w3"], params["b3"]
    d_in, h = w1.shape
    d_out = w3.shape[1]
    d_in_p = _round_up(d_in, _LANE)
    h_p = _round_up(h, _LANE)
    d_out_p = _round_up(d_out, _LANE)

    def pad2(w, rows, cols):
        return jnp.pad(w, ((0, rows - w.shape[0]), (0, cols - w.shape[1])))

    def pad1(b, cols):
        return jnp.pad(b, (0, cols - b.shape[0])).reshape(1, cols)

    return {
        "w1": pad2(w1, d_in_p, h_p).astype(weight_dtype),
        "b1": pad1(b1, h_p).astype(jnp.float32),
        "w2": pad2(w2, h_p, h_p).astype(weight_dtype),
        "b2": pad1(b2, h_p).astype(jnp.float32),
        "w3": pad2(w3, h_p, d_out_p).astype(weight_dtype),
        "b3": pad1(b3, d_out_p).astype(jnp.float32),
        "d_in": d_in,
        "out_dim": d_out,
    }


@functools.partial(jax.jit, static_argnames=("tm",))
def _rnd_da_forward_padded(x_p, w1, b1, w2, b2, w3, b3, *, tm):
    bp, d_in_p = x_p.shape
    h_p = w1.shape[1]
    d_out_p = w3.shape[1]
    grid = (bp // tm,)
    return pl.pallas_call(
        _mlp_kernel,
        out_shape=jax.ShapeDtypeStruct((bp, d_out_p), jnp.float32),
        grid=grid,
        in_specs=[
            # Batch-tiled activations.
            pl.BlockSpec((tm, d_in_p), lambda i: (i, 0)),
            # Weights/biases: constant index_map -> loaded once, VMEM-resident.
            pl.BlockSpec((d_in_p, h_p), lambda i: (0, 0)),
            pl.BlockSpec((1, h_p), lambda i: (0, 0)),
            pl.BlockSpec((h_p, h_p), lambda i: (0, 0)),
            pl.BlockSpec((1, h_p), lambda i: (0, 0)),
            pl.BlockSpec((h_p, d_out_p), lambda i: (0, 0)),
            pl.BlockSpec((1, d_out_p), lambda i: (0, 0)),
        ],
        out_specs=pl.BlockSpec((tm, d_out_p), lambda i: (i, 0)),
        compiler_params=pltpu.CompilerParams(
            dimension_semantics=("parallel",)),
    )(x_p, w1, b1, w2, b2, w3, b3)


def rnd_da_forward(das_vec, prepared, tm=None):
    """Pallas forward for RND_DA.net.

    das_vec:  (2*a_dim,) single concatenated DA vector (original module
              semantics) or (B, 2*a_dim) batch of them.  float32.
    prepared: output of prepare_params().
    Returns:  (out_dim,) or (B, out_dim) float32.
    """
    single = das_vec.ndim == 1
    x = das_vec[None, :] if single else das_vec
    b, d_in = x.shape
    d_in_p = prepared["w1"].shape[0]
    d_out = prepared["out_dim"]

    if tm is None:
        # Batch tile: multiple of the sublane (8), capped at 256 (v6e/v7x
        # MXU-friendly).  tm divides the padded batch by construction.
        tm = min(256, _round_up(b, _SUBLANE))
    bp = _round_up(b, tm)

    x_p = jnp.pad(x.astype(jnp.float32), ((0, bp - b), (0, d_in_p - d_in)))
    out = _rnd_da_forward_padded(
        x_p, prepared["w1"], prepared["b1"], prepared["w2"],
        prepared["b2"], prepared["w3"], prepared["b3"], tm=tm)
    out = out[:b, :d_out]
    return out[0] if single else out


def init_params(key, a_dim, rnd_h_dim, out_dim):
    """Deterministic init mimicking PyTorch nn.Linear default
    (uniform(-1/sqrt(fan_in), 1/sqrt(fan_in))), weights stored (in, out)."""
    def linear(k, fan_in, fan_out):
        kw, kb = jax.random.split(k)
        bound = 1.0 / math.sqrt(fan_in)
        w = jax.random.uniform(kw, (fan_in, fan_out), jnp.float32, -bound, bound)
        b = jax.random.uniform(kb, (fan_out,), jnp.float32, -bound, bound)
        return w, b

    k1, k2, k3 = jax.random.split(key, 3)
    w1, b1 = linear(k1, 2 * a_dim, rnd_h_dim)
    w2, b2 = linear(k2, rnd_h_dim, rnd_h_dim)
    w3, b3 = linear(k3, rnd_h_dim, out_dim)
    return {"w1": w1, "b1": b1, "w2": w2, "b2": b2, "w3": w3, "b3": b3}


if __name__ == "__main__":
    # Small shapes consistent with the module (real defaults: rnd_h_dim=524,
    # out_dim=340; those pad to 640/384 with the same code path).
    a_dim = 32          # DA vocab size -> input dim 2*a_dim = 64
    rnd_h_dim = 128
    out_dim = 64
    batch = 300         # exercises a multi-tile grid (3 tiles of TM=128)

    key = jax.random.PRNGKey(0)
    k_params, k_das = jax.random.split(key)
    params = init_params(k_params, a_dim, rnd_h_dim, out_dim)

    # Simulated binary dialog-act vectors (what action_vectorize would yield),
    # already concatenated [user_da_vec, sys_da_vec].
    das_batch = (jax.random.uniform(k_das, (batch, 2 * a_dim)) < 0.2).astype(jnp.float32)

    # Pure-JAX f32 reference of the same MLP (full-precision matmuls).
    hi = jax.lax.Precision.HIGHEST
    ref = jnp.maximum(jnp.dot(das_batch, params["w1"], precision=hi) + params["b1"], 0.0)
    ref = jnp.maximum(jnp.dot(ref, params["w2"], precision=hi) + params["b2"], 0.0)
    ref = jnp.dot(ref, params["w3"], precision=hi) + params["b3"]

    # 1) f32 weights: tight numerical check.
    prepared_f32 = prepare_params(params, weight_dtype=jnp.float32)
    out_f32 = rnd_da_forward(das_batch, prepared_f32, tm=128)
    jax.block_until_ready(out_f32)
    assert out_f32.shape == (batch, out_dim)
    assert jnp.allclose(out_f32, ref, atol=1e-4, rtol=1e-4)

    # 2) bf16 weights (default perf path: half the weight DMA, 2x MXU rate):
    #    looser check against the f32 reference.
    prepared_bf16 = prepare_params(params, weight_dtype=jnp.bfloat16)
    out_bf16 = rnd_da_forward(das_batch, prepared_bf16, tm=128)
    jax.block_until_ready(out_bf16)
    assert out_bf16.shape == (batch, out_dim)
    assert jnp.allclose(out_bf16, ref, atol=5e-2, rtol=5e-2)

    # 3) Original module semantics: one concatenated DA vector per call.
    single = rnd_da_forward(das_batch[0], prepared_f32)
    jax.block_until_ready(single)
    assert single.shape == (out_dim,)
    assert jnp.allclose(single, out_f32[0], atol=1e-5, rtol=1e-5)

    print("KERNEL_OK")
</pallas_src>

<mosaic_0001>
module attributes {stable_mosaic.version = 11 : i64} {
  func.func @_mlp_kernel(%arg0: i32, %arg1: memref<128x128xf32, #tpu.memory_space<vmem>>, %arg2: memref<128x128xf32, #tpu.memory_space<vmem>>, %arg3: memref<1x128xf32, #tpu.memory_space<vmem>>, %arg4: memref<128x128xf32, #tpu.memory_space<vmem>>, %arg5: memref<1x128xf32, #tpu.memory_space<vmem>>, %arg6: memref<128x128xf32, #tpu.memory_space<vmem>>, %arg7: memref<1x128xf32, #tpu.memory_space<vmem>>, %arg8: memref<128x128xf32, #tpu.memory_space<vmem>>) attributes {dimension_semantics = [#tpu.dimension_semantics<parallel>], iteration_bounds = array<i64: 3>, scalar_prefetch = 0 : i64, scratch_operands = 0 : i64, tpu.core_type = #tpu.core_type<tc>, window_params = [{transform_indices = @transform_0, window_bounds = array<i64: 128, 128>}, {pipeline_mode = #tpu.pipeline_mode<synchronous>, transform_indices = @transform_1, window_bounds = array<i64: 128, 128>}, {pipeline_mode = #tpu.pipeline_mode<synchronous>, transform_indices = @transform_2, window_bounds = array<i64: 1, 128>}, {pipeline_mode = #tpu.pipeline_mode<synchronous>, transform_indices = @transform_3, window_bounds = array<i64: 128, 128>}, {pipeline_mode = #tpu.pipeline_mode<synchronous>, transform_indices = @transform_4, window_bounds = array<i64: 1, 128>}, {pipeline_mode = #tpu.pipeline_mode<synchronous>, transform_indices = @transform_5, window_bounds = array<i64: 128, 128>}, {pipeline_mode = #tpu.pipeline_mode<synchronous>, transform_indices = @transform_6, window_bounds = array<i64: 1, 128>}, {transform_indices = @transform_7, window_bounds = array<i64: 128, 128>}]} {
    %c0 = arith.constant 0 : index
    %c0_0 = arith.constant 0 : index
    %0 = vector.load %arg1[%c0, %c0_0] : memref<128x128xf32, #tpu.memory_space<vmem>>, vector<128x128xf32>
    %c0_1 = arith.constant 0 : index
    %c0_2 = arith.constant 0 : index
    %1 = vector.load %arg2[%c0_1, %c0_2] : memref<128x128xf32, #tpu.memory_space<vmem>>, vector<128x128xf32>
    %cst = arith.constant dense<0.000000e+00> : vector<128x128xf32>
    %2 = tpu.matmul %0, %1, %cst {dimension_numbers = #tpu.dot_dimension_numbers<[1], [0], [0], [1], [0, 0, 1, 1], [], []>} : vector<128x128xf32>, vector<128x128xf32>, vector<128x128xf32> -> vector<128x128xf32>
    %c0_3 = arith.constant 0 : index
    %c0_4 = arith.constant 0 : index
    %3 = vector.load %arg3[%c0_3, %c0_4] : memref<1x128xf32, #tpu.memory_space<vmem>>, vector<1x128xf32>
    %4 = vector.broadcast %3 : vector<1x128xf32> to vector<128x128xf32>
    %5 = arith.addf %2, %4 : vector<128x128xf32>
    %cst_5 = arith.constant 0.000000e+00 : f32
    %6 = vector.broadcast %cst_5 : f32 to vector<128x128xf32>
    %7 = arith.maximumf %5, %6 : vector<128x128xf32>
    %c0_6 = arith.constant 0 : index
    %c0_7 = arith.constant 0 : index
    %8 = vector.load %arg4[%c0_6, %c0_7] : memref<128x128xf32, #tpu.memory_space<vmem>>, vector<128x128xf32>
    %cst_8 = arith.constant dense<0.000000e+00> : vector<128x128xf32>
    %9 = tpu.matmul %7, %8, %cst_8 {dimension_numbers = #tpu.dot_dimension_numbers<[1], [0], [0], [1], [0, 0, 1, 1], [], []>} : vector<128x128xf32>, vector<128x128xf32>, vector<128x128xf32> -> vector<128x128xf32>
    %c0_9 = arith.constant 0 : index
    %c0_10 = arith.constant 0 : index
    %10 = vector.load %arg5[%c0_9, %c0_10] : memref<1x128xf32, #tpu.memory_space<vmem>>, vector<1x128xf32>
    %11 = vector.broadcast %10 : vector<1x128xf32> to vector<128x128xf32>
    %12 = arith.addf %9, %11 : vector<128x128xf32>
    %cst_11 = arith.constant 0.000000e+00 : f32
    %13 = vector.broadcast %cst_11 : f32 to vector<128x128xf32>
    %14 = arith.maximumf %12, %13 : vector<128x128xf32>
    %c0_12 = arith.constant 0 : index
    %c0_13 = arith.constant 0 : index
    %15 = vector.load %arg6[%c0_12, %c0_13] : memref<128x128xf32, #tpu.memory_space<vmem>>, vector<128x128xf32>
    %cst_14 = arith.constant dense<0.000000e+00> : vector<128x128xf32>
    %16 = tpu.matmul %14, %15, %cst_14 {dimension_numbers = #tpu.dot_dimension_numbers<[1], [0], [0], [1], [0, 0, 1, 1], [], []>} : vector<128x128xf32>, vector<128x128xf32>, vector<128x128xf32> -> vector<128x128xf32>
    %c0_15 = arith.constant 0 : index
    %c0_16 = arith.constant 0 : index
    %17 = vector.load %arg7[%c0_15, %c0_16] : memref<1x128xf32, #tpu.memory_space<vmem>>, vector<1x128xf32>
    %18 = vector.broadcast %17 : vector<1x128xf32> to vector<128x128xf32>
    %19 = arith.addf %16, %18 : vector<128x128xf32>
    %c0_17 = arith.constant 0 : index
    %c0_18 = arith.constant 0 : index
    %20 = vector.load %arg8[%c0_17, %c0_18] : memref<128x128xf32, #tpu.memory_space<vmem>>, vector<128x128xf32>
    tpu.vector_store %arg8[%c0_17, %c0_18], %19 {strides = array<i32>} : memref<128x128xf32, #tpu.memory_space<vmem>>, vector<128x128xf32>,
    return
  }
  func.func @transform_0(%arg0: i32) -> (i32, i32) {
    %c0_i32 = arith.constant 0 : i32
    %c0_i32_0 = arith.constant 0 : i32
    return %arg0, %c0_i32 : i32, i32
  }
  func.func @transform_1(%arg0: i32) -> (i32, i32) {
    %c0_i32 = arith.constant 0 : i32
    %c0_i32_0 = arith.constant 0 : i32
    %c0_i32_1 = arith.constant 0 : i32
    return %c0_i32, %c0_i32_0 : i32, i32
  }
  func.func @transform_2(%arg0: i32) -> (i32, i32) {
    %c0_i32 = arith.constant 0 : i32
    %c0_i32_0 = arith.constant 0 : i32
    %c0_i32_1 = arith.constant 0 : i32
    return %c0_i32, %c0_i32_0 : i32, i32
  }
  func.func @transform_3(%arg0: i32) -> (i32, i32) {
    %c0_i32 = arith.constant 0 : i32
    %c0_i32_0 = arith.constant 0 : i32
    %c0_i32_1 = arith.constant 0 : i32
    return %c0_i32, %c0_i32_0 : i32, i32
  }
  func.func @transform_4(%arg0: i32) -> (i32, i32) {
    %c0_i32 = arith.constant 0 : i32
    %c0_i32_0 = arith.constant 0 : i32
    %c0_i32_1 = arith.constant 0 : i32
    return %c0_i32, %c0_i32_0 : i32, i32
  }
  func.func @transform_5(%arg0: i32) -> (i32, i32) {
    %c0_i32 = arith.constant 0 : i32
    %c0_i32_0 = arith.constant 0 : i32
    %c0_i32_1 = arith.constant 0 : i32
    return %c0_i32, %c0_i32_0 : i32, i32
  }
  func.func @transform_6(%arg0: i32) -> (i32, i32) {
    %c0_i32 = arith.constant 0 : i32
    %c0_i32_0 = arith.constant 0 : i32
    %c0_i32_1 = arith.constant 0 : i32
    return %c0_i32, %c0_i32_0 : i32, i32
  }
  func.func @transform_7(%arg0: i32) -> (i32, i32) {
    %c0_i32 = arith.constant 0 : i32
    %c0_i32_0 = arith.constant 0 : i32
    return %arg0, %c0_i32 : i32, i32
  }
}

</mosaic_0001>

<llo_original>
// kernel: _rnd_da_forward_padded.1
$region0: #{_rnd_da_forward_padded.1}
  #allocation0 [shape = 'u32[]', space=smem, size = 0x4, offset = 0x4, fixed_abs, tag = 'smem constant byte address 0x4 - core index']
  #allocation1 [shape = 'u32[144,128]{1,0:T(1,128)}', space=vmem, size = 0x12000, scoped, tag = 'internal scratch']
  %s0 = inlined_call_operand.hbm [shape: f32[384,128], index: 0, kind: input, shape index: {}]
  %s1 = inlined_call_operand.hbm [shape: f32[128,128], index: 1, kind: input, shape index: {}]
  %s2 = inlined_call_operand.vmem [shape: f32[1,128], index: 2, kind: input, shape index: {}]
  %s3 = inlined_call_operand.hbm [shape: f32[128,128], index: 3, kind: input, shape index: {}]
  %s4 = inlined_call_operand.vmem [shape: f32[1,128], index: 4, kind: input, shape index: {}]
  %s5 = inlined_call_operand.hbm [shape: f32[128,128], index: 5, kind: input, shape index: {}]
  %s6 = inlined_call_operand.vmem [shape: f32[1,128], index: 6, kind: input, shape index: {}]
  %s7 = inlined_call_operand.hbm [shape: f32[384,128], index: 7, kind: output, shape index: {}]
  %s8 = sld [smem:[#allocation0]]
  $region77: #{_rnd_da_forward_padded.1} parent=0
    _
  %s10 = ssub.s32 1, %s8
  %s11 = scalar_select 0, %s10, %s8
  $region1: #{_rnd_da_forward_padded.1} parent=0
    #allocation2 [shape = 'u8[131072]{0}', space=vmem, size = 0x20000, scoped, tag = 'input window, operand 0']
    #allocation3 [shape = 's32[2]{0}', space=sflag, size = 0x8, scoped, tag = 'scoped memory for _rnd_da_forward_padded.1']
    #allocation4 [shape = 's32[2]{0}', space=sflag, size = 0x8, scoped, tag = 'scoped memory for _rnd_da_forward_padded.1']
    #allocation5 [shape = 'u8[65536]{0}', space=vmem, size = 0x10000, scoped, tag = 'input window, operand 1, single buffered']
    #allocation6 [shape = 's32[1]{0}', space=sflag, size = 0x4, scoped, tag = 'scoped memory for _rnd_da_forward_padded.1']
    #allocation7 [shape = 'u8[65536]{0}', space=vmem, size = 0x10000, scoped, tag = 'input window, operand 3, single buffered']
    #allocation8 [shape = 'u8[65536]{0}', space=vmem, size = 0x10000, scoped, tag = 'input window, operand 5, single buffered']
    #allocation9 [shape = 's32[1]{0}', space=sflag, size = 0x4, scoped, tag = 'scoped memory for _rnd_da_forward_padded.1']
    #allocation10 [shape = 'u8[131072]{0}', space=vmem, size = 0x20000, scoped, tag = 'output window, operand 0']
    %12 = vsyncpa [#allocation3], 0
    %s13 = scalar_lea.sflag [#allocation3], 1
    %14 = vsyncpa %s13, 0
    %15 = vsyncpa [#allocation6], 0
    %16 = vsyncpa [#allocation9], 0
    %17 = vsyncpa [#allocation4], 0
    %s18 = scalar_lea.sflag [#allocation4], 1
    %19 = vsyncpa %s18, 0
    loop: start=0, step=1, limit=5
    $region2: #{_rnd_da_forward_padded.1} parent=1 // loop_pre_header
      _
    $region3: #{_rnd_da_forward_padded.1} parent=1 // loop_header
      %s21 = sphi 0, %s25
      %p22 = scmp.ge.s32.totalorder %s21, 5
      %s31 = sphi 0, %s33
      %s34 = sphi 0, %s31
      %s35 = sphi 0, %s34
      %s51 = sphi 0, %s35
      %s55 = sphi 0, %s55
      %s57 = sphi 0, %s55
      %s58 = sphi 0, %s57
      %s72 = sphi 0, %s58
      %s76 = sphi 0, %s76
      %s78 = sphi 0, %s76
      %s79 = sphi 0, %s78
      %s93 = sphi 0, %s79
      %s97 = sphi 0, %s97
      %s99 = sphi 0, %s97
      %s100 = sphi 0, %s99
      %s114 = sphi 0, %s100
      %s118 = sphi 0, %s118
      %s120 = sphi 0, %s118
      %s121 = sphi 0, %s120
      %s135 = sphi 0, %s121
      %s139 = sphi 0, %s139
      %s141 = sphi 0, %s139
      %s142 = sphi 0, %s141
      %s156 = sphi 0, %s142
      %s160 = sphi 0, %s160
      %s162 = sphi 0, %s160
      %s163 = sphi 0, %s162
      %s177 = sphi 0, %s163
      %s183 = sphi 0, %s185
      %s186 = sphi 0, %s183
      %s187 = sphi 0, %s186
      %s203 = sphi 0, %s187
    $region4: #{_rnd_da_forward_padded.1} parent=1 // loop_header_branch
      %24 = sbr.rel (%p22) target = $region8
    $region5: #{_rnd_da_forward_padded.1} parent=1 // loop_body
      %s26 = ssub.s32 %s21, 1
      %s27 = ssub.s32 %s21, 2
      %s28 = sadd.s32 %s21, 1
      %s29 = ssub.s32 %s21, %s28
      %p30 = scmp.eq.s32.totalorder %s29, 0
      %s32 = sadd.s32 %s31, 1
      %s33 = scalar_select %p30, %s31, %s32
      %p36 = pneg %p30
      %p37 = scmp.eq.s32.totalorder %s21, 2
      %p38 = por %p36, %p37
      %p39 = scmp.ne.s32.totalorder %s31, %s34
      %p40 = scmp.eq.s32.totalorder %s21, 0
      %p41 = por %p39, %p40
      %p42 = scmp.ne.s32.totalorder %s31, %s34
      %p43 = scmp.eq.s32.totalorder %s26, 2
      %p44 = por %p42, %p43
      %p45 = scmp.ne.s32.totalorder %s34, %s35
      %p46 = scmp.eq.s32.totalorder %s26, 0
      %p47 = por %p45, %p46
      %p48 = scmp.ne.s32.totalorder %s34, %s35
      %p49 = scmp.eq.s32.totalorder %s27, 2
      %p50 = por %p48, %p49
      %p52 = scmp.ne.s32.totalorder %s35, %s51
      %p53 = scmp.eq.s32.totalorder %s27, 0
      %p54 = por %p52, %p53
      %s56 = sadd.s32 %s55, 1
      %p59 = scmp.eq.s32.totalorder %s21, 2
      %p60 = scmp.ne.s32.totalorder %s55, %s57
      %p61 = scmp.eq.s32.totalorder %s21, 0
      %p62 = por %p60, %p61
      %p63 = scmp.ne.s32.totalorder %s55, %s57
      %p64 = scmp.eq.s32.totalorder %s26, 2
      %p65 = por %p63, %p64
      %p66 = scmp.ne.s32.totalorder %s57, %s58
      %p67 = scmp.eq.s32.totalorder %s26, 0
      %p68 = por %p66, %p67
      %p69 = scmp.ne.s32.totalorder %s57, %s58
      %p70 = scmp.eq.s32.totalorder %s27, 2
      %p71 = por %p69, %p70
      %p73 = scmp.ne.s32.totalorder %s58, %s72
      %p74 = scmp.eq.s32.totalorder %s27, 0
      %p75 = por %p73, %p74
      %s77 = sadd.s32 %s76, 1
      %p80 = scmp.eq.s32.totalorder %s21, 2
      %p81 = scmp.ne.s32.totalorder %s76, %s78
      %p82 = scmp.eq.s32.totalorder %s21, 0
      %p83 = por %p81, %p82
      %p84 = scmp.ne.s32.totalorder %s76, %s78
      %p85 = scmp.eq.s32.totalorder %s26, 2
      %p86 = por %p84, %p85
      %p87 = scmp.ne.s32.totalorder %s78, %s79
      %p88 = scmp.eq.s32.totalorder %s26, 0
      %p89 = por %p87, %p88
      %p90 = scmp.ne.s32.totalorder %s78, %s79
      %p91 = scmp.eq.s32.totalorder %s27, 2
      %p92 = por %p90, %p91
      %p94 = scmp.ne.s32.totalorder %s79, %s93
      %p95 = scmp.eq.s32.totalorder %s27, 0
      %p96 = por %p94, %p95
      %s98 = sadd.s32 %s97, 1
      %p101 = scmp.eq.s32.totalorder %s21, 2
      %p102 = scmp.ne.s32.totalorder %s97, %s99
      %p103 = scmp.eq.s32.totalorder %s21, 0
      %p104 = por %p102, %p103
      %p105 = scmp.ne.s32.totalorder %s97, %s99
      %p106 = scmp.eq.s32.totalorder %s26, 2
      %p107 = por %p105, %p106
      %p108 = scmp.ne.s32.totalorder %s99, %s100
      %p109 = scmp.eq.s32.totalorder %s26, 0
      %p110 = por %p108, %p109
      %p111 = scmp.ne.s32.totalorder %s99, %s100
      %p112 = scmp.eq.s32.totalorder %s27, 2
      %p113 = por %p111, %p112
      %p115 = scmp.ne.s32.totalorder %s100, %s114
      %p116 = scmp.eq.s32.totalorder %s27, 0
      %p117 = por %p115, %p116
      %s119 = sadd.s32 %s118, 1
      %p122 = scmp.eq.s32.totalorder %s21, 2
      %p123 = scmp.ne.s32.totalorder %s118, %s120
      %p124 = scmp.eq.s32.totalorder %s21, 0
      %p125 = por %p123, %p124
      %p126 = scmp.ne.s32.totalorder %s118, %s120
      %p127 = scmp.eq.s32.totalorder %s26, 2
      %p128 = por %p126, %p127
      %p129 = scmp.ne.s32.totalorder %s120, %s121
      %p130 = scmp.eq.s32.totalorder %s26, 0
      %p131 = por %p129, %p130
      %p132 = scmp.ne.s32.totalorder %s120, %s121
      %p133 = scmp.eq.s32.totalorder %s27, 2
      %p134 = por %p132, %p133
      %p136 = scmp.ne.s32.totalorder %s121, %s135
      %p137 = scmp.eq.s32.totalorder %s27, 0
      %p138 = por %p136, %p137
      %s140 = sadd.s32 %s139, 1
      %p143 = scmp.eq.s32.totalorder %s21, 2
      %p144 = scmp.ne.s32.totalorder %s139, %s141
      %p145 = scmp.eq.s32.totalorder %s21, 0
      %p146 = por %p144, %p145
      %p147 = scmp.ne.s32.totalorder %s139, %s141
      %p148 = scmp.eq.s32.totalorder %s26, 2
      %p149 = por %p147, %p148
      %p150 = scmp.ne.s32.totalorder %s141, %s142
      %p151 = scmp.eq.s32.totalorder %s26, 0
      %p152 = por %p150, %p151
      %p153 = scmp.ne.s32.totalorder %s141, %s142
      %p154 = scmp.eq.s32.totalorder %s27, 2
      %p155 = por %p153, %p154
      %p157 = scmp.ne.s32.totalorder %s142, %s156
      %p158 = scmp.eq.s32.totalorder %s27, 0
      %p159 = por %p157, %p158
      %s161 = sadd.s32 %s160, 1
      %p164 = scmp.eq.s32.totalorder %s21, 2
      %p165 = scmp.ne.s32.totalorder %s160, %s162
      %p166 = scmp.eq.s32.totalorder %s21, 0
      %p167 = por %p165, %p166
      %p168 = scmp.ne.s32.totalorder %s160, %s162
      %p169 = scmp.eq.s32.totalorder %s26, 2
      %p170 = por %p168, %p169
      %p171 = scmp.ne.s32.totalorder %s162, %s163
      %p172 = scmp.eq.s32.totalorder %s26, 0
      %p173 = por %p171, %p172
      %p174 = scmp.ne.s32.totalorder %s162, %s163
      %p175 = scmp.eq.s32.totalorder %s27, 2
      %p176 = por %p174, %p175
      %p178 = scmp.ne.s32.totalorder %s163, %s177
      %p179 = scmp.eq.s32.totalorder %s27, 0
      %p180 = por %p178, %p179
      %s181 = ssub.s32 %s21, %s28
      %p182 = scmp.eq.s32.totalorder %s181, 0
      %s184 = sadd.s32 %s183, 1
      %s185 = scalar_select %p182, %s183, %s184
      %p188 = pneg %p182
      %p189 = scmp.eq.s32.totalorder %s21, 2
      %p190 = por %p188, %p189
      %p191 = scmp.ne.s32.totalorder %s183, %s186
      %p192 = scmp.eq.s32.totalorder %s21, 0
      %p193 = por %p191, %p192
      %p194 = scmp.ne.s32.totalorder %s183, %s186
      %p195 = scmp.eq.s32.totalorder %s26, 2
      %p196 = por %p194, %p195
      %p197 = scmp.ne.s32.totalorder %s186, %s187
      %p198 = scmp.eq.s32.totalorder %s26, 0
      %p199 = por %p197, %p198
      %p200 = scmp.ne.s32.totalorder %s186, %s187
      %p201 = scmp.eq.s32.totalorder %s27, 2
      %p202 = por %p200, %p201
      %p204 = scmp.ne.s32.totalorder %s187, %s203
      %p205 = scmp.eq.s32.totalorder %s27, 0
      %p206 = por %p204, %p205
      %p207 = scmp.le.s32.totalorder 1, %s21
      %p208 = scmp.lt.s32.totalorder %s21, 4
      %p209 = pnand %p207, %p208
      %p210 = pneg %p209
      // Predicated region
      $region9: #{_rnd_da_forward_padded.1} parent=5 // pred_check
        _
      $region10: #{_rnd_da_forward_padded.1} parent=5 // pred_check_branch
        %212 = sbr.rel (%p209) target = $region12
      $region11: #{_rnd_da_forward_padded.1} parent=5 // pred_region
        %s213 = ssub.s32 %s21, 1
        // Predicated region
        $region13: #{_rnd_da_forward_padded.1} parent=11 // pred_check
          %p214 = pneg %p68
        $region14: #{_rnd_da_forward_padded.1} parent=11 // pred_check_branch
          %216 = sbr.rel (%p214) target = $region16
        $region15: #{_rnd_da_forward_padded.1} parent=11 // pred_region
          %s218 = ssub.s32 2048, 2048
          %219 = vsyncadd [#allocation6], %s218
          %s220 = sshll.u32 [#allocation5], 4
          %s221 = int_to_ptr.vmem [resolvable:$true] %s220
          %226 = dma.hbm_to_vmem [thread:$0]  %s1, 2048, %s221, [#allocation6], 128, 128, 8
        $region16: #{_rnd_da_forward_padded.1} parent=11 // pred_fallthru
          _
        // Predicated region
        $region17: #{_rnd_da_forward_padded.1} parent=11 // pred_check
          %p227 = pneg %p89
        $region18: #{_rnd_da_forward_padded.1} parent=11 // pred_check_branch
          %229 = sbr.rel (%p227) target = $region20
        $region19: #{_rnd_da_forward_padded.1} parent=11 // pred_region
          _
        $region20: #{_rnd_da_forward_padded.1} parent=11 // pred_fallthru
          _
        // Predicated region
        $region21: #{_rnd_da_forward_padded.1} parent=11 // pred_check
          %p230 = pneg %p110
        $region22: #{_rnd_da_forward_padded.1} parent=11 // pred_check_branch
          %232 = sbr.rel (%p230) target = $region24
        $region23: #{_rnd_da_forward_padded.1} parent=11 // pred_region
          %s234 = ssub.s32 2048, 2048
          %235 = vsyncadd [#allocation6], %s234
          %s236 = sshll.u32 [#allocation7], 4
          %s237 = int_to_ptr.vmem [resolvable:$true] %s236
          %242 = dma.hbm_to_vmem [thread:$0]  %s3, 2048, %s237, [#allocation6], 128, 128, 8
        $region24: #{_rnd_da_forward_padded.1} parent=11 // pred_fallthru
          _
        // Predicated region
        $region25: #{_rnd_da_forward_padded.1} parent=11 // pred_check
          %p243 = pneg %p131
        $region26: #{_rnd_da_forward_padded.1} parent=11 // pred_check_branch
          %245 = sbr.rel (%p243) target = $region28
        $region27: #{_rnd_da_forward_padded.1} parent=11 // pred_region
          _
        $region28: #{_rnd_da_forward_padded.1} parent=11 // pred_fallthru
          _
        // Predicated region
        $region29: #{_rnd_da_forward_padded.1} parent=11 // pred_check
          %p246 = pneg %p152
        $region30: #{_rnd_da_forward_padded.1} parent=11 // pred_check_branch
          %248 = sbr.rel (%p246) target = $region32
        $region31: #{_rnd_da_forward_padded.1} parent=11 // pred_region
          %s250 = ssub.s32 2048, 2048
          %251 = vsyncadd [#allocation9], %s250
          %s252 = sshll.u32 [#allocation8], 4
          %s253 = int_to_ptr.vmem [resolvable:$true] %s252
          %258 = dma.hbm_to_vmem [thread:$0]  %s5, 2048, %s253, [#allocation9], 128, 128, 8
        $region32: #{_rnd_da_forward_padded.1} parent=11 // pred_fallthru
          _
        // Predicated region
        $region33: #{_rnd_da_forward_padded.1} parent=11 // pred_check
          %p259 = pneg %p173
        $region34: #{_rnd_da_forward_padded.1} parent=11 // pred_check_branch
          %261 = sbr.rel (%p259) target = $region36
        $region35: #{_rnd_da_forward_padded.1} parent=11 // pred_region
          _
        $region36: #{_rnd_da_forward_padded.1} parent=11 // pred_fallthru
          _
      $region12: #{_rnd_da_forward_padded.1} parent=5 // pred_fallthru
        _
      %p262 = scmp.lt.s32.totalorder %s21, 3
      // Predicated region
      $region37: #{_rnd_da_forward_padded.1} parent=5 // pred_check
        %p263 = pneg %p262
      $region38: #{_rnd_da_forward_padded.1} parent=5 // pred_check_branch
        %265 = sbr.rel (%p263) target = $region40
      $region39: #{_rnd_da_forward_padded.1} parent=5 // pred_region
        // Predicated region
        $region41: #{_rnd_da_forward_padded.1} parent=39 // pred_check
          %p266 = pneg %p41
        $region42: #{_rnd_da_forward_padded.1} parent=39 // pred_check_branch
          %268 = sbr.rel (%p266) target = $region44
        $region43: #{_rnd_da_forward_padded.1} parent=39 // pred_region
          %s269 = sand.u32 %s31, 1
          %s270 = scalar_lea.sflag [#allocation3], %s269
          %s271 = sand.u32 %s31, 1
          %s272 = smul.addr %s271, 128
          %s273 = scalar_lea.vmem [#allocation2], %s272
          %s274 = smul.u32 16, %s21
          %s276 = ssub.s32 2048, 2048
          %277 = vsyncadd %s270, %s276
          %s278 = smul.addr %s274, 128
          %s279 = scalar_lea.hbm %s0, %s278
          %s280 = sshll.u32 %s273, 4
          %s281 = int_to_ptr.vmem [resolvable:$true] %s280
          %286 = dma.hbm_to_vmem [thread:$0]  %s279, 2048, %s281, %s270, 128, 128, 8
        $region44: #{_rnd_da_forward_padded.1} parent=39 // pred_fallthru
          _
      $region40: #{_rnd_da_forward_padded.1} parent=5 // pred_fallthru
        _
      %p287 = scmp.le.s32.totalorder 1, %s21
      %p288 = scmp.lt.s32.totalorder %s21, 4
      %p289 = pnand %p287, %p288
      %p290 = pneg %p289
      // Predicated region
      $region45: #{_rnd_da_forward_padded.1} parent=5 // pred_check
        _
      $region46: #{_rnd_da_forward_padded.1} parent=5 // pred_check_branch
        %292 = sbr.rel (%p289) target = $region48
      $region47: #{_rnd_da_forward_padded.1} parent=5 // pred_region
        %s293 = ssub.s32 %s21, 1
        %s294 = sand.u32 %s34, 1
        %s295 = scalar_lea.sflag [#allocation3], %s294
        %s296 = sand.u32 %s34, 1
        %s297 = smul.addr %s296, 128
        %s298 = scalar_lea.vmem [#allocation2], %s297
        // Predicated region
        $region49: #{_rnd_da_forward_padded.1} parent=47 // pred_check
          %p299 = pneg %p47
        $region50: #{_rnd_da_forward_padded.1} parent=47 // pred_check_branch
          %301 = sbr.rel (%p299) target = $region52
        $region51: #{_rnd_da_forward_padded.1} parent=47 // pred_region
          %302 = dma.done %s295, 2048
        $region52: #{_rnd_da_forward_padded.1} parent=47 // pred_fallthru
          _
        // Predicated region
        $region53: #{_rnd_da_forward_padded.1} parent=47 // pred_check
          %p303 = pneg %p68
        $region54: #{_rnd_da_forward_padded.1} parent=47 // pred_check_branch
          %305 = sbr.rel (%p303) target = $region56
        $region55: #{_rnd_da_forward_padded.1} parent=47 // pred_region
          %306 = dma.done [#allocation6], 2048
        $region56: #{_rnd_da_forward_padded.1} parent=47 // pred_fallthru
          _
        // Predicated region
        $region57: #{_rnd_da_forward_padded.1} parent=47 // pred_check
          %p307 = pneg %p110
        $region58: #{_rnd_da_forward_padded.1} parent=47 // pred_check_branch
          %309 = sbr.rel (%p307) target = $region60
        $region59: #{_rnd_da_forward_padded.1} parent=47 // pred_region
          %310 = dma.done [#allocation6], 2048
        $region60: #{_rnd_da_forward_padded.1} parent=47 // pred_fallthru
          _
        // Predicated region
        $region61: #{_rnd_da_forward_padded.1} parent=47 // pred_check
          %p311 = pneg %p152
        $region62: #{_rnd_da_forward_padded.1} parent=47 // pred_check_branch
          %313 = sbr.rel (%p311) target = $region64
        $region63: #{_rnd_da_forward_padded.1} parent=47 // pred_region
          %314 = dma.done [#allocation9], 2048
        $region64: #{_rnd_da_forward_padded.1} parent=47 // pred_fallthru
          _
        %s315 = sand.u32 %s34, 1
        %s316 = scalar_lea.sflag [#allocation3], %s315
        %s317 = sand.u32 %s34, 1
        %s318 = smul.addr %s317, 128
        %s319 = scalar_lea.vmem [#allocation2], %s318
        %p320 = pneg %p47
        %p321 = pneg %p44
        %p322 = pneg %p68
        %p323 = pneg %p65
        %p324 = pneg %p89
        %p325 = pneg %p86
        %p326 = pneg %p110
        %p327 = pneg %p107
        %p328 = pneg %p131
        %p329 = pneg %p128
        %p330 = pneg %p152
        %p331 = pneg %p149
        %p332 = pneg %p173
        %p333 = pneg %p170
        %p334 = pneg %p199
        %p335 = pneg %p196
        %s336 = sand.u32 %s186, 1
        %s337 = scalar_lea.sflag [#allocation4], %s336
        %s338 = sand.u32 %s186, 1
        %s339 = smul.addr %s338, 128
        %s340 = scalar_lea.vmem [#allocation10], %s339
        %s341 = smul.u32 16, %s26
        %s342 = smul.u32 16, %s26
        %v343 = vld [vmem:[%s298] sm:$0xff]
        %v344 = vld [vmem:[%s298 + $0x8] sm:$0xff]
        %v345 = vld [vmem:[%s298 + $0x10] sm:$0xff]
        %v346 = vld [vmem:[%s298 + $0x18] sm:$0xff]
        %v347 = vld [vmem:[%s298 + $0x20] sm:$0xff]
        %v348 = vld [vmem:[%s298 + $0x28] sm:$0xff]
        %v349 = vld [vmem:[%s298 + $0x30] sm:$0xff]
        %v350 = vld [vmem:[%s298 + $0x38] sm:$0xff]
        %v351 = vld [vmem:[%s298 + $0x40] sm:$0xff]
        %v352 = vld [vmem:[%s298 + $0x48] sm:$0xff]
        %v353 = vld [vmem:[%s298 + $0x50] sm:$0xff]
        %v354 = vld [vmem:[%s298 + $0x58] sm:$0xff]
        %v355 = vld [vmem:[%s298 + $0x60] sm:$0xff]
        %v356 = vld [vmem:[%s298 + $0x68] sm:$0xff]
        %v357 = vld [vmem:[%s298 + $0x70] sm:$0xff]
        %v358 = vld [vmem:[%s298 + $0x78] sm:$0xff]
        %v359 = vld [vmem:[#allocation5] sm:$0xff]
        %v360 = vld [vmem:[#allocation5 + $0x8] sm:$0xff]
        %v361 = vld [vmem:[#allocation5 + $0x10] sm:$0xff]
        %v362 = vld [vmem:[#allocation5 + $0x18] sm:$0xff]
        %v363 = vld [vmem:[#allocation5 + $0x20] sm:$0xff]
        %v364 = vld [vmem:[#allocation5 + $0x28] sm:$0xff]
        %v365 = vld [vmem:[#allocation5 + $0x30] sm:$0xff]
        %v366 = vld [vmem:[#allocation5 + $0x38] sm:$0xff]
        %v367 = vld [vmem:[#allocation5 + $0x40] sm:$0xff]
        %v368 = vld [vmem:[#allocation5 + $0x48] sm:$0xff]
        %v369 = vld [vmem:[#allocation5 + $0x50] sm:$0xff]
        %v370 = vld [vmem:[#allocation5 + $0x58] sm:$0xff]
        %v371 = vld [vmem:[#allocation5 + $0x60] sm:$0xff]
        %v372 = vld [vmem:[#allocation5 + $0x68] sm:$0xff]
        %v373 = vld [vmem:[#allocation5 + $0x70] sm:$0xff]
        %v374 = vld [vmem:[#allocation5 + $0x78] sm:$0xff]
        %v375 = vld [vmem:[%s2] sm:$0x1]
        %v377 = vlaneseq
        %v378 = vshrl.u32 %v377, 7
        %v379 = vsub.s32 0, %v378
        %v380 = vrot.slane %v375, %v379
        %382 = vmatprep.subr.mxu0 0.0
        %383 = vmatpush1.msra.mxu0 %v359
        %384 = vmatprep.subr.mxu0 0.0
        %385 = vmatpush1.msra.mxu0 %v360
        %386 = vmatprep.subr.mxu0 0.0
        %387 = vmatpush1.msra.mxu0 %v361
        %388 = vmatprep.subr.mxu0 0.0
        %389 = vmatpush1.msra.mxu0 %v362
        %390 = vmatprep.subr.mxu0 0.0
        %391 = vmatpush1.msra.mxu0 %v363
        %392 = vmatprep.subr.mxu0 0.0
        %393 = vmatpush1.msra.mxu0 %v364
        %394 = vmatprep.subr.mxu0 0.0
        %395 = vmatpush1.msra.mxu0 %v365
        %396 = vmatprep.subr.mxu0 0.0
        %397 = vmatpush1.msra.mxu0 %v366
        %398 = vmatprep.subr.mxu0 0.0
        %399 = vmatpush1.msra.mxu0 %v367
        %400 = vmatprep.subr.mxu0 0.0
        %401 = vmatpush1.msra.mxu0 %v368
        %402 = vmatprep.subr.mxu0 0.0
        %403 = vmatpush1.msra.mxu0 %v369
        %404 = vmatprep.subr.mxu0 0.0
        %405 = vmatpush1.msra.mxu0 %v370
        %406 = vmatprep.subr.mxu0 0.0
        %407 = vmatpush1.msra.mxu0 %v371
        %408 = vmatprep.subr.mxu0 0.0
        %409 = vmatpush1.msra.mxu0 %v372
        %410 = vmatprep.subr.mxu0 0.0
        %411 = vmatpush1.msra.mxu0 %v373
        %412 = vmatprep.subr.mxu0 0.0
        %413 = vmatpush1.msra.mxu0 %v374
        %414 = vmatprep.subr.mxu0 0.0
        %415 = vmatpush1.msra.mxu0 0.0
        %416 = vmatprep.subr.mxu0 0.0
        %417 = vmatpush1.msra.mxu0 0.0
        %418 = vmatprep.subr.mxu0 0.0
        %419 = vmatpush1.msra.mxu0 0.0
        %420 = vmatprep.subr.mxu0 0.0
        %421 = vmatpush1.msra.mxu0 0.0
        %422 = vmatprep.subr.mxu0 0.0
        %423 = vmatpush1.msra.mxu0 0.0
        %424 = vmatprep.subr.mxu0 0.0
        %425 = vmatpush1.msra.mxu0 0.0
        %426 = vmatprep.subr.mxu0 0.0
        %427 = vmatpush1.msra.mxu0 0.0
        %428 = vmatprep.subr.mxu0 0.0
        %429 = vmatpush1.msra.mxu0 0.0
        %430 = vmatprep.subr.mxu0 0.0
        %431 = vmatpush1.msra.mxu0 0.0
        %432 = vmatprep.subr.mxu0 0.0
        %433 = vmatpush1.msra.mxu0 0.0
        %434 = vmatprep.subr.mxu0 0.0
        %435 = vmatpush1.msra.mxu0 0.0
        %436 = vmatprep.subr.mxu0 0.0
        %437 = vmatpush1.msra.mxu0 0.0
        %438 = vmatprep.subr.mxu0 0.0
        %439 = vmatpush1.msra.mxu0 0.0
        %440 = vmatprep.subr.mxu0 0.0
        %441 = vmatpush1.msra.mxu0 0.0
        %442 = vmatprep.subr.mxu0 0.0
        %443 = vmatpush1.msra.mxu0 0.0
        %444 = vmatprep.subr.mxu0 0.0
        %445 = vmatpush1.msra.mxu0 0.0
        %446 = vmatprep.mubr.f32.mxu0 0.0
        %447 = vmatmul.mubr.f32.gmra.mrb[0].mxu0 %v343
        %v448 = vpop.f32.mrb[0].mxu0
        %v449 = vadd.f32 %v380, %v448
        %v450 = vpop.f32.mrb[0].mxu0
        %451 = vmatprep.mubr.f32.mxu0 0.0
        %452 = vmatmul.mubr.f32.gmra.mrb[0].mxu0 %v344
        %v453 = vpop.f32.mrb[0].mxu0
        %v454 = vadd.f32 %v380, %v453
        %v455 = vpop.f32.mrb[0].mxu0
        %456 = vmatprep.mubr.f32.mxu0 0.0
        %457 = vmatmul.mubr.f32.gmra.mrb[0].mxu0 %v345
        %v458 = vpop.f32.mrb[0].mxu0
        %v459 = vadd.f32 %v380, %v458
        %v460 = vpop.f32.mrb[0].mxu0
        %461 = vmatprep.mubr.f32.mxu0 0.0
        %462 = vmatmul.mubr.f32.gmra.mrb[0].mxu0 %v346
        %v463 = vpop.f32.mrb[0].mxu0
        %v464 = vadd.f32 %v380, %v463
        %v465 = vpop.f32.mrb[0].mxu0
        %466 = vmatprep.mubr.f32.mxu0 0.0
        %467 = vmatmul.mubr.f32.gmra.mrb[0].mxu0 %v347
        %v468 = vpop.f32.mrb[0].mxu0
        %v469 = vadd.f32 %v380, %v468
        %v470 = vpop.f32.mrb[0].mxu0
        %471 = vmatprep.mubr.f32.mxu0 0.0
        %472 = vmatmul.mubr.f32.gmra.mrb[0].mxu0 %v348
        %v473 = vpop.f32.mrb[0].mxu0
        %v474 = vadd.f32 %v380, %v473
        %v475 = vpop.f32.mrb[0].mxu0
        %476 = vmatprep.mubr.f32.mxu0 0.0
        %477 = vmatmul.mubr.f32.gmra.mrb[0].mxu0 %v349
        %v478 = vpop.f32.mrb[0].mxu0
        %v479 = vadd.f32 %v380, %v478
        %v480 = vpop.f32.mrb[0].mxu0
        %481 = vmatprep.mubr.f32.mxu0 0.0
        %482 = vmatmul.mubr.f32.gmra.mrb[0].mxu0 %v350
        %v483 = vpop.f32.mrb[0].mxu0
        %v484 = vadd.f32 %v380, %v483
        %v485 = vpop.f32.mrb[0].mxu0
        %486 = vmatprep.mubr.f32.mxu0 0.0
        %487 = vmatmul.mubr.f32.gmra.mrb[0].mxu0 %v351
        %v488 = vpop.f32.mrb[0].mxu0
        %v489 = vadd.f32 %v380, %v488
        %v490 = vpop.f32.mrb[0].mxu0
        %491 = vmatprep.mubr.f32.mxu0 0.0
        %492 = vmatmul.mubr.f32.gmra.mrb[0].mxu0 %v352
        %v493 = vpop.f32.mrb[0].mxu0
        %v494 = vadd.f32 %v380, %v493
        %v495 = vpop.f32.mrb[0].mxu0
        %496 = vmatprep.mubr.f32.mxu0 0.0
        %497 = vmatmul.mubr.f32.gmra.mrb[0].mxu0 %v353
        %v498 = vpop.f32.mrb[0].mxu0
        %v499 = vadd.f32 %v380, %v498
        %v500 = vpop.f32.mrb[0].mxu0
        %501 = vmatprep.mubr.f32.mxu0 0.0
        %502 = vmatmul.mubr.f32.gmra.mrb[0].mxu0 %v354
        %v503 = vpop.f32.mrb[0].mxu0
        %v504 = vadd.f32 %v380, %v503
        %v505 = vpop.f32.mrb[0].mxu0
        %506 = vmatprep.mubr.f32.mxu0 0.0
        %507 = vmatmul.mubr.f32.gmra.mrb[0].mxu0 %v355
        %v508 = vpop.f32.mrb[0].mxu0
        %v509 = vadd.f32 %v380, %v508
        %v510 = vpop.f32.mrb[0].mxu0
        %511 = vmatprep.mubr.f32.mxu0 0.0
        %512 = vmatmul.mubr.f32.gmra.mrb[0].mxu0 %v356
        %v513 = vpop.f32.mrb[0].mxu0
        %v514 = vadd.f32 %v380, %v513
        %v515 = vpop.f32.mrb[0].mxu0
        %516 = vmatprep.mubr.f32.mxu0 0.0
        %517 = vmatmul.mubr.f32.gmra.mrb[0].mxu0 %v357
        %v518 = vpop.f32.mrb[0].mxu0
        %v519 = vadd.f32 %v380, %v518
        %v520 = vpop.f32.mrb[0].mxu0
        %521 = vmatprep.mubr.f32.mxu0 0.0
        %522 = vmatmul.mubr.f32.gmra.mrb[0].mxu0 %v358
        %v523 = vpop.f32.mrb[0].mxu0
        %v524 = vadd.f32 %v380, %v523
        %v525 = vpop.f32.mrb[0].mxu0
        %526 = vdwg.mxu0
        %v527 = vmax.f32 %v449, 0.0
        %v528 = vmax.f32 %v454, 0.0
        %v529 = vmax.f32 %v459, 0.0
        %v530 = vmax.f32 %v464, 0.0
        %v531 = vmax.f32 %v469, 0.0
        %v532 = vmax.f32 %v474, 0.0
        %v533 = vmax.f32 %v479, 0.0
        %v534 = vmax.f32 %v484, 0.0
        %v535 = vmax.f32 %v489, 0.0
        %v536 = vmax.f32 %v494, 0.0
        %v537 = vmax.f32 %v499, 0.0
        %v538 = vmax.f32 %v504, 0.0
        %v539 = vmax.f32 %v509, 0.0
        %v540 = vmax.f32 %v514, 0.0
        %v541 = vmax.f32 %v519, 0.0
        %v542 = vmax.f32 %v524, 0.0
        %v543 = vld [vmem:[#allocation7] sm:$0xff]
        %v544 = vld [vmem:[#allocation7 + $0x8] sm:$0xff]
        %v545 = vld [vmem:[#allocation7 + $0x10] sm:$0xff]
        %v546 = vld [vmem:[#allocation7 + $0x18] sm:$0xff]
        %v547 = vld [vmem:[#allocation7 + $0x20] sm:$0xff]
        %v548 = vld [vmem:[#allocation7 + $0x28] sm:$0xff]
        %v549 = vld [vmem:[#allocation7 + $0x30] sm:$0xff]
        %v550 = vld [vmem:[#allocation7 + $0x38] sm:$0xff]
        %v551 = vld [vmem:[#allocation7 + $0x40] sm:$0xff]
        %v552 = vld [vmem:[#allocation7 + $0x48] sm:$0xff]
        %v553 = vld [vmem:[#allocation7 + $0x50] sm:$0xff]
        %v554 = vld [vmem:[#allocation7 + $0x58] sm:$0xff]
        %v555 = vld [vmem:[#allocation7 + $0x60] sm:$0xff]
        %v556 = vld [vmem:[#allocation7 + $0x68] sm:$0xff]
        %v557 = vld [vmem:[#allocation7 + $0x70] sm:$0xff]
        %v558 = vld [vmem:[#allocation7 + $0x78] sm:$0xff]
        %v559 = vld [vmem:[%s4] sm:$0x1]
        %v561 = vlaneseq
        %v562 = vshrl.u32 %v561, 7
        %v563 = vsub.s32 0, %v562
        %v564 = vrot.slane %v559, %v563
        %566 = vmatprep.subr.mxu0 0.0
        %567 = vmatpush1.msra.mxu0 %v543
        %568 = vmatprep.subr.mxu0 0.0
        %569 = vmatpush1.msra.mxu0 %v544
        %570 = vmatprep.subr.mxu0 0.0
        %571 = vmatpush1.msra.mxu0 %v545
        %572 = vmatprep.subr.mxu0 0.0
        %573 = vmatpush1.msra.mxu0 %v546
        %574 = vmatprep.subr.mxu0 0.0
        %575 = vmatpush1.msra.mxu0 %v547
        %576 = vmatprep.subr.mxu0 0.0
        %577 = vmatpush1.msra.mxu0 %v548
        %578 = vmatprep.subr.mxu0 0.0
        %579 = vmatpush1.msra.mxu0 %v549
        %580 = vmatprep.subr.mxu0 0.0
        %581 = vmatpush1.msra.mxu0 %v550
        %582 = vmatprep.subr.mxu0 0.0
        %583 = vmatpush1.msra.mxu0 %v551
        %584 = vmatprep.subr.mxu0 0.0
        %585 = vmatpush1.msra.mxu0 %v552
        %586 = vmatprep.subr.mxu0 0.0
        %587 = vmatpush1.msra.mxu0 %v553
        %588 = vmatprep.subr.mxu0 0.0
        %589 = vmatpush1.msra.mxu0 %v554
        %590 = vmatprep.subr.mxu0 0.0
        %591 = vmatpush1.msra.mxu0 %v555
        %592 = vmatprep.subr.mxu0 0.0
        %593 = vmatpush1.msra.mxu0 %v556
        %594 = vmatprep.subr.mxu0 0.0
        %595 = vmatpush1.msra.mxu0 %v557
        %596 = vmatprep.subr.mxu0 0.0
        %597 = vmatpush1.msra.mxu0 %v558
        %598 = vmatprep.subr.mxu0 0.0
        %599 = vmatpush1.msra.mxu0 0.0
        %600 = vmatprep.subr.mxu0 0.0
        %601 = vmatpush1.msra.mxu0 0.0
        %602 = vmatprep.subr.mxu0 0.0
        %603 = vmatpush1.msra.mxu0 0.0
        %604 = vmatprep.subr.mxu0 0.0
        %605 = vmatpush1.msra.mxu0 0.0
        %606 = vmatprep.subr.mxu0 0.0
        %607 = vmatpush1.msra.mxu0 0.0
        %608 = vmatprep.subr.mxu0 0.0
        %609 = vmatpush1.msra.mxu0 0.0
        %610 = vmatprep.subr.mxu0 0.0
        %611 = vmatpush1.msra.mxu0 0.0
        %612 = vmatprep.subr.mxu0 0.0
        %613 = vmatpush1.msra.mxu0 0.0
        %614 = vmatprep.subr.mxu0 0.0
        %615 = vmatpush1.msra.mxu0 0.0
        %616 = vmatprep.subr.mxu0 0.0
        %617 = vmatpush1.msra.mxu0 0.0
        %618 = vmatprep.subr.mxu0 0.0
        %619 = vmatpush1.msra.mxu0 0.0
        %620 = vmatprep.subr.mxu0 0.0
        %621 = vmatpush1.msra.mxu0 0.0
        %622 = vmatprep.subr.mxu0 0.0
        %623 = vmatpush1.msra.mxu0 0.0
        %624 = vmatprep.subr.mxu0 0.0
        %625 = vmatpush1.msra.mxu0 0.0
        %626 = vmatprep.subr.mxu0 0.0
        %627 = vmatpush1.msra.mxu0 0.0
        %628 = vmatprep.subr.mxu0 0.0
        %629 = vmatpush1.msra.mxu0 0.0
        %630 = vmatprep.mubr.f32.mxu0 0.0
        %631 = vmatmul.mubr.f32.gmra.mrb[0].mxu0 %v527
        %v632 = vpop.f32.mrb[0].mxu0
        %v633 = vadd.f32 %v564, %v632
        %v634 = vpop.f32.mrb[0].mxu0
        %635 = vmatprep.mubr.f32.mxu0 0.0
        %636 = vmatmul.mubr.f32.gmra.mrb[0].mxu0 %v528
        %v637 = vpop.f32.mrb[0].mxu0
        %v638 = vadd.f32 %v564, %v637
        %v639 = vpop.f32.mrb[0].mxu0
        %640 = vmatprep.mubr.f32.mxu0 0.0
        %641 = vmatmul.mubr.f32.gmra.mrb[0].mxu0 %v529
        %v642 = vpop.f32.mrb[0].mxu0
        %v643 = vadd.f32 %v564, %v642
        %v644 = vpop.f32.mrb[0].mxu0
        %645 = vmatprep.mubr.f32.mxu0 0.0
        %646 = vmatmul.mubr.f32.gmra.mrb[0].mxu0 %v530
        %v647 = vpop.f32.mrb[0].mxu0
        %v648 = vadd.f32 %v564, %v647
        %v649 = vpop.f32.mrb[0].mxu0
        %650 = vmatprep.mubr.f32.mxu0 0.0
        %651 = vmatmul.mubr.f32.gmra.mrb[0].mxu0 %v531
        %v652 = vpop.f32.mrb[0].mxu0
        %v653 = vadd.f32 %v564, %v652
        %v654 = vpop.f32.mrb[0].mxu0
        %655 = vmatprep.mubr.f32.mxu0 0.0
        %656 = vmatmul.mubr.f32.gmra.mrb[0].mxu0 %v532
        %v657 = vpop.f32.mrb[0].mxu0
        %v658 = vadd.f32 %v564, %v657
        %v659 = vpop.f32.mrb[0].mxu0
        %660 = vmatprep.mubr.f32.mxu0 0.0
        %661 = vmatmul.mubr.f32.gmra.mrb[0].mxu0 %v533
        %v662 = vpop.f32.mrb[0].mxu0
        %v663 = vadd.f32 %v564, %v662
        %v664 = vpop.f32.mrb[0].mxu0
        %665 = vmatprep.mubr.f32.mxu0 0.0
        %666 = vmatmul.mubr.f32.gmra.mrb[0].mxu0 %v534
        %v667 = vpop.f32.mrb[0].mxu0
        %v668 = vadd.f32 %v564, %v667
        %v669 = vpop.f32.mrb[0].mxu0
        %670 = vmatprep.mubr.f32.mxu0 0.0
        %671 = vmatmul.mubr.f32.gmra.mrb[0].mxu0 %v535
        %v672 = vpop.f32.mrb[0].mxu0
        %v673 = vadd.f32 %v564, %v672
        %v674 = vpop.f32.mrb[0].mxu0
        %675 = vmatprep.mubr.f32.mxu0 0.0
        %676 = vmatmul.mubr.f32.gmra.mrb[0].mxu0 %v536
        %v677 = vpop.f32.mrb[0].mxu0
        %v678 = vadd.f32 %v564, %v677
        %v679 = vpop.f32.mrb[0].mxu0
        %680 = vmatprep.mubr.f32.mxu0 0.0
        %681 = vmatmul.mubr.f32.gmra.mrb[0].mxu0 %v537
        %v682 = vpop.f32.mrb[0].mxu0
        %v683 = vadd.f32 %v564, %v682
        %v684 = vpop.f32.mrb[0].mxu0
        %685 = vmatprep.mubr.f32.mxu0 0.0
        %686 = vmatmul.mubr.f32.gmra.mrb[0].mxu0 %v538
        %v687 = vpop.f32.mrb[0].mxu0
        %v688 = vadd.f32 %v564, %v687
        %v689 = vpop.f32.mrb[0].mxu0
        %690 = vmatprep.mubr.f32.mxu0 0.0
        %691 = vmatmul.mubr.f32.gmra.mrb[0].mxu0 %v539
        %v692 = vpop.f32.mrb[0].mxu0
        %v693 = vadd.f32 %v564, %v692
        %v694 = vpop.f32.mrb[0].mxu0
        %695 = vmatprep.mubr.f32.mxu0 0.0
        %696 = vmatmul.mubr.f32.gmra.mrb[0].mxu0 %v540
        %v697 = vpop.f32.mrb[0].mxu0
        %v698 = vadd.f32 %v564, %v697
        %v699 = vpop.f32.mrb[0].mxu0
        %700 = vmatprep.mubr.f32.mxu0 0.0
        %701 = vmatmul.mubr.f32.gmra.mrb[0].mxu0 %v541
        %v702 = vpop.f32.mrb[0].mxu0
        %v703 = vadd.f32 %v564, %v702
        %v704 = vpop.f32.mrb[0].mxu0
        %705 = vmatprep.mubr.f32.mxu0 0.0
        %706 = vmatmul.mubr.f32.gmra.mrb[0].mxu0 %v542
        %v707 = vpop.f32.mrb[0].mxu0
        %v708 = vadd.f32 %v564, %v707
        %v709 = vpop.f32.mrb[0].mxu0
        %710 = vdwg.mxu0
        %v711 = vmax.f32 %v633, 0.0
        %v712 = vmax.f32 %v638, 0.0
        %v713 = vmax.f32 %v643, 0.0
        %v714 = vmax.f32 %v648, 0.0
        %v715 = vmax.f32 %v653, 0.0
        %v716 = vmax.f32 %v658, 0.0
        %v717 = vmax.f32 %v663, 0.0
        %v718 = vmax.f32 %v668, 0.0
        %v719 = vmax.f32 %v673, 0.0
        %v720 = vmax.f32 %v678, 0.0
        %v721 = vmax.f32 %v683, 0.0
        %v722 = vmax.f32 %v688, 0.0
        %v723 = vmax.f32 %v693, 0.0
        %v724 = vmax.f32 %v698, 0.0
        %v725 = vmax.f32 %v703, 0.0
        %v726 = vmax.f32 %v708, 0.0
        %v727 = vld [vmem:[#allocation8] sm:$0xff]
        %v728 = vld [vmem:[#allocation8 + $0x8] sm:$0xff]
        %v729 = vld [vmem:[#allocation8 + $0x10] sm:$0xff]
        %v730 = vld [vmem:[#allocation8 + $0x18] sm:$0xff]
        %v731 = vld [vmem:[#allocation8 + $0x20] sm:$0xff]
        %v732 = vld [vmem:[#allocation8 + $0x28] sm:$0xff]
        %v733 = vld [vmem:[#allocation8 + $0x30] sm:$0xff]
        %v734 = vld [vmem:[#allocation8 + $0x38] sm:$0xff]
        %v735 = vld [vmem:[#allocation8 + $0x40] sm:$0xff]
        %v736 = vld [vmem:[#allocation8 + $0x48] sm:$0xff]
        %v737 = vld [vmem:[#allocation8 + $0x50] sm:$0xff]
        %v738 = vld [vmem:[#allocation8 + $0x58] sm:$0xff]
        %v739 = vld [vmem:[#allocation8 + $0x60] sm:$0xff]
        %v740 = vld [vmem:[#allocation8 + $0x68] sm:$0xff]
        %v741 = vld [vmem:[#allocation8 + $0x70] sm:$0xff]
        %v742 = vld [vmem:[#allocation8 + $0x78] sm:$0xff]
        %v743 = vld [vmem:[%s6] sm:$0x1]
        %v745 = vlaneseq
        %v746 = vshrl.u32 %v745, 7
        %v747 = vsub.s32 0, %v746
        %v748 = vrot.slane %v743, %v747
        %750 = vmatprep.subr.mxu0 0.0
        %751 = vmatpush1.msra.mxu0 %v727
        %752 = vmatprep.subr.mxu0 0.0
        %753 = vmatpush1.msra.mxu0 %v728
        %754 = vmatprep.subr.mxu0 0.0
        %755 = vmatpush1.msra.mxu0 %v729
        %756 = vmatprep.subr.mxu0 0.0
        %757 = vmatpush1.msra.mxu0 %v730
        %758 = vmatprep.subr.mxu0 0.0
        %759 = vmatpush1.msra.mxu0 %v731
        %760 = vmatprep.subr.mxu0 0.0
        %761 = vmatpush1.msra.mxu0 %v732
        %762 = vmatprep.subr.mxu0 0.0
        %763 = vmatpush1.msra.mxu0 %v733
        %764 = vmatprep.subr.mxu0 0.0
        %765 = vmatpush1.msra.mxu0 %v734
        %766 = vmatprep.subr.mxu0 0.0
        %767 = vmatpush1.msra.mxu0 %v735
        %768 = vmatprep.subr.mxu0 0.0
        %769 = vmatpush1.msra.mxu0 %v736
        %770 = vmatprep.subr.mxu0 0.0
        %771 = vmatpush1.msra.mxu0 %v737
        %772 = vmatprep.subr.mxu0 0.0
        %773 = vmatpush1.msra.mxu0 %v738
        %774 = vmatprep.subr.mxu0 0.0
        %775 = vmatpush1.msra.mxu0 %v739
        %776 = vmatprep.subr.mxu0 0.0
        %777 = vmatpush1.msra.mxu0 %v740
        %778 = vmatprep.subr.mxu0 0.0
        %779 = vmatpush1.msra.mxu0 %v741
        %780 = vmatprep.subr.mxu0 0.0
        %781 = vmatpush1.msra.mxu0 %v742
        %782 = vmatprep.subr.mxu0 0.0
        %783 = vmatpush1.msra.mxu0 0.0
        %784 = vmatprep.subr.mxu0 0.0
        %785 = vmatpush1.msra.mxu0 0.0
        %786 = vmatprep.subr.mxu0 0.0
        %787 = vmatpush1.msra.mxu0 0.0
        %788 = vmatprep.subr.mxu0 0.0
        %789 = vmatpush1.msra.mxu0 0.0
        %790 = vmatprep.subr.mxu0 0.0
        %791 = vmatpush1.msra.mxu0 0.0
        %792 = vmatprep.subr.mxu0 0.0
        %793 = vmatpush1.msra.mxu0 0.0
        %794 = vmatprep.subr.mxu0 0.0
        %795 = vmatpush1.msra.mxu0 0.0
        %796 = vmatprep.subr.mxu0 0.0
        %797 = vmatpush1.msra.mxu0 0.0
        %798 = vmatprep.subr.mxu0 0.0
        %799 = vmatpush1.msra.mxu0 0.0
        %800 = vmatprep.subr.mxu0 0.0
        %801 = vmatpush1.msra.mxu0 0.0
        %802 = vmatprep.subr.mxu0 0.0
        %803 = vmatpush1.msra.mxu0 0.0
        %804 = vmatprep.subr.mxu0 0.0
        %805 = vmatpush1.msra.mxu0 0.0
        %806 = vmatprep.subr.mxu0 0.0
        %807 = vmatpush1.msra.mxu0 0.0
        %808 = vmatprep.subr.mxu0 0.0
        %809 = vmatpush1.msra.mxu0 0.0
        %810 = vmatprep.subr.mxu0 0.0
        %811 = vmatpush1.msra.mxu0 0.0
        %812 = vmatprep.subr.mxu0 0.0
        %813 = vmatpush1.msra.mxu0 0.0
        %814 = vmatprep.mubr.f32.mxu0 0.0
        %815 = vmatmul.mubr.f32.gmra.mrb[0].mxu0 %v711
        %v816 = vpop.f32.mrb[0].mxu0
        %v817 = vadd.f32 %v748, %v816
        %v818 = vpop.f32.mrb[0].mxu0
        %819 = vmatprep.mubr.f32.mxu0 0.0
        %820 = vmatmul.mubr.f32.gmra.mrb[0].mxu0 %v712
        %v821 = vpop.f32.mrb[0].mxu0
        %v822 = vadd.f32 %v748, %v821
        %v823 = vpop.f32.mrb[0].mxu0
        %824 = vmatprep.mubr.f32.mxu0 0.0
        %825 = vmatmul.mubr.f32.gmra.mrb[0].mxu0 %v713
        %v826 = vpop.f32.mrb[0].mxu0
        %v827 = vadd.f32 %v748, %v826
        %v828 = vpop.f32.mrb[0].mxu0
        %829 = vmatprep.mubr.f32.mxu0 0.0
        %830 = vmatmul.mubr.f32.gmra.mrb[0].mxu0 %v714
        %v831 = vpop.f32.mrb[0].mxu0
        %v832 = vadd.f32 %v748, %v831
        %v833 = vpop.f32.mrb[0].mxu0
        %834 = vmatprep.mubr.f32.mxu0 0.0
        %835 = vmatmul.mubr.f32.gmra.mrb[0].mxu0 %v715
        %v836 = vpop.f32.mrb[0].mxu0
        %v837 = vadd.f32 %v748, %v836
        %v838 = vpop.f32.mrb[0].mxu0
        %839 = vmatprep.mubr.f32.mxu0 0.0
        %840 = vmatmul.mubr.f32.gmra.mrb[0].mxu0 %v716
        %v841 = vpop.f32.mrb[0].mxu0
        %v842 = vadd.f32 %v748, %v841
        %v843 = vpop.f32.mrb[0].mxu0
        %844 = vmatprep.mubr.f32.mxu0 0.0
        %845 = vmatmul.mubr.f32.gmra.mrb[0].mxu0 %v717
        %v846 = vpop.f32.mrb[0].mxu0
        %v847 = vadd.f32 %v748, %v846
        %v848 = vpop.f32.mrb[0].mxu0
        %849 = vmatprep.mubr.f32.mxu0 0.0
        %850 = vmatmul.mubr.f32.gmra.mrb[0].mxu0 %v718
        %v851 = vpop.f32.mrb[0].mxu0
        %v852 = vadd.f32 %v748, %v851
        %v853 = vpop.f32.mrb[0].mxu0
        %854 = vmatprep.mubr.f32.mxu0 0.0
        %855 = vmatmul.mubr.f32.gmra.mrb[0].mxu0 %v719
        %v856 = vpop.f32.mrb[0].mxu0
        %v857 = vadd.f32 %v748, %v856
        %v858 = vpop.f32.mrb[0].mxu0
        %859 = vmatprep.mubr.f32.mxu0 0.0
        %860 = vmatmul.mubr.f32.gmra.mrb[0].mxu0 %v720
        %v861 = vpop.f32.mrb[0].mxu0
        %v862 = vadd.f32 %v748, %v861
        %v863 = vpop.f32.mrb[0].mxu0
        %864 = vmatprep.mubr.f32.mxu0 0.0
        %865 = vmatmul.mubr.f32.gmra.mrb[0].mxu0 %v721
        %v866 = vpop.f32.mrb[0].mxu0
        %v867 = vadd.f32 %v748, %v866
        %v868 = vpop.f32.mrb[0].mxu0
        %869 = vmatprep.mubr.f32.mxu0 0.0
        %870 = vmatmul.mubr.f32.gmra.mrb[0].mxu0 %v722
        %v871 = vpop.f32.mrb[0].mxu0
        %v872 = vadd.f32 %v748, %v871
        %v873 = vpop.f32.mrb[0].mxu0
        %874 = vmatprep.mubr.f32.mxu0 0.0
        %875 = vmatmul.mubr.f32.gmra.mrb[0].mxu0 %v723
        %v876 = vpop.f32.mrb[0].mxu0
        %v877 = vadd.f32 %v748, %v876
        %v878 = vpop.f32.mrb[0].mxu0
        %879 = vmatprep.mubr.f32.mxu0 0.0
        %880 = vmatmul.mubr.f32.gmra.mrb[0].mxu0 %v724
        %v881 = vpop.f32.mrb[0].mxu0
        %v882 = vadd.f32 %v748, %v881
        %v883 = vpop.f32.mrb[0].mxu0
        %884 = vmatprep.mubr.f32.mxu0 0.0
        %885 = vmatmul.mubr.f32.gmra.mrb[0].mxu0 %v725
        %v886 = vpop.f32.mrb[0].mxu0
        %v887 = vadd.f32 %v748, %v886
        %v888 = vpop.f32.mrb[0].mxu0
        %889 = vmatprep.mubr.f32.mxu0 0.0
        %890 = vmatmul.mubr.f32.gmra.mrb[0].mxu0 %v726
        %v891 = vpop.f32.mrb[0].mxu0
        %v892 = vadd.f32 %v748, %v891
        %v893 = vpop.f32.mrb[0].mxu0
        %894 = vdwg.mxu0
        %895 = vst [vmem:[%s340] sm:$0xff] %v817
        %896 = vst [vmem:[%s340 + $0x8] sm:$0xff] %v822
        %897 = vst [vmem:[%s340 + $0x10] sm:$0xff] %v827
        %898 = vst [vmem:[%s340 + $0x18] sm:$0xff] %v832
        %899 = vst [vmem:[%s340 + $0x20] sm:$0xff] %v837
        %900 = vst [vmem:[%s340 + $0x28] sm:$0xff] %v842
        %901 = vst [vmem:[%s340 + $0x30] sm:$0xff] %v847
        %902 = vst [vmem:[%s340 + $0x38] sm:$0xff] %v852
        %903 = vst [vmem:[%s340 + $0x40] sm:$0xff] %v857
        %904 = vst [vmem:[%s340 + $0x48] sm:$0xff] %v862
        %905 = vst [vmem:[%s340 + $0x50] sm:$0xff] %v867
        %906 = vst [vmem:[%s340 + $0x58] sm:$0xff] %v872
        %907 = vst [vmem:[%s340 + $0x60] sm:$0xff] %v877
        %908 = vst [vmem:[%s340 + $0x68] sm:$0xff] %v882
        %909 = vst [vmem:[%s340 + $0x70] sm:$0xff] %v887
        %910 = vst [vmem:[%s340 + $0x78] sm:$0xff] %v892
        %s911 = sand.u32 %s186, 1
        %s912 = scalar_lea.sflag [#allocation4], %s911
        %s913 = sand.u32 %s186, 1
        %s914 = smul.addr %s913, 128
        %s915 = scalar_lea.vmem [#allocation10], %s914
        // Predicated region
        $region65: #{_rnd_da_forward_padded.1} parent=47 // pred_check
          %p916 = pneg %p196
        $region66: #{_rnd_da_forward_padded.1} parent=47 // pred_check_branch
          %918 = sbr.rel (%p916) target = $region68
        $region67: #{_rnd_da_forward_padded.1} parent=47 // pred_region
          %s919 = smul.u32 16, %s26
          %s921 = ssub.s32 2048, 2048
          %922 = vsyncadd %s912, %s921
          %s923 = smul.addr %s919, 128
          %s924 = scalar_lea.hbm %s7, %s923
          %s925 = sshll.u32 %s915, 4
          %s926 = int_to_ptr.vmem [resolvable:$true] %s925
          %931 = dma.vmem_to_hbm [thread:$0]  %s926, 2048, %s924, %s912, 128, 128, 8
        $region68: #{_rnd_da_forward_padded.1} parent=47 // pred_fallthru
          _
      $region48: #{_rnd_da_forward_padded.1} parent=5 // pred_fallthru
        _
      %p932 = scmp.le.s32.totalorder 2, %s21
      // Predicated region
      $region69: #{_rnd_da_forward_padded.1} parent=5 // pred_check
        %p933 = pneg %p932
      $region70: #{_rnd_da_forward_padded.1} parent=5 // pred_check_branch
        %935 = sbr.rel (%p933) target = $region72
      $region71: #{_rnd_da_forward_padded.1} parent=5 // pred_region
        %s936 = ssub.s32 %s21, 2
        // Predicated region
        $region73: #{_rnd_da_forward_padded.1} parent=71 // pred_check
          %p937 = pneg %p202
        $region74: #{_rnd_da_forward_padded.1} parent=71 // pred_check_branch
          %939 = sbr.rel (%p937) target = $region76
        $region75: #{_rnd_da_forward_padded.1} parent=71 // pred_region
          %s940 = sand.u32 %s187, 1
          %s941 = scalar_lea.sflag [#allocation4], %s940
          %s942 = sand.u32 %s187, 1
          %s943 = smul.addr %s942, 128
          %s944 = scalar_lea.vmem [#allocation10], %s943
          %945 = dma.done %s941, 2048
        $region76: #{_rnd_da_forward_padded.1} parent=71 // pred_fallthru
          _
      $region72: #{_rnd_da_forward_padded.1} parent=5 // pred_fallthru
        _
    $region6: #{_rnd_da_forward_padded.1} parent=1 // loop_footer
      %s25 = sadd.s32 1, %s21
    $region7: #{_rnd_da_forward_padded.1} parent=1 // loop_footer_branch
      %20 = sbr.rel target = $region3
    $region8: #{_rnd_da_forward_padded.1} parent=1 // loop_exit
      _
    %946 = vsyncpa [#allocation3], 1
    %s947 = scalar_lea.sflag [#allocation3], 1
    %948 = vsyncpa %s947, 1
    %949 = vsyncpa [#allocation6], 1
    %950 = vsyncpa [#allocation9], 1
    %951 = vsyncpa [#allocation4], 1
    %s952 = scalar_lea.sflag [#allocation4], 1
    %953 = vsyncpa %s952, 1

</llo_original>
